<compile_context>
chip_gen: v7x
topology: tpu7x:2x2x1
jax: 0.10.0
libtpu: 0.0.40
codegen_flags: <defaults>
</compile_context>

<pallas_src>
import functools

import jax
import jax.numpy as jnp
from jax.experimental import pallas as pl
from jax.experimental.pallas import tpu as pltpu

HIDDEN = 64
LANE = 128        # TPU lane width; packed slabs and the mean output are 128-lane dense.
SUBLANE = 8       # f32 sublane tile
BF16_ROWS = 16    # bf16 packs 2 rows/sublane -> keep slab segment offsets 16-aligned


def _round_up(n, m):
    return (n + m - 1) // m * m


@functools.lru_cache(maxsize=None)
def _act_dtype():
    """tanh dtype: bf16 on v6e/v7x (bf16 EUP), f32 on v5e (no bf16 VPU/EUP)."""
    try:
        kind = jax.devices()[0].device_kind.lower()
    except Exception:
        return jnp.bfloat16
    if "v5 lite" in kind or "v5e" in kind or "v5lite" in kind:
        return jnp.float32
    return jnp.bfloat16


def policy_kernel(x_ref, w_ref, b_ref, mean_ref, *, s_pad, hidden, act_dtype):
    """One batch tile of the actor MLP; all three matmuls + tanh fused."""
    x = x_ref[...].astype(jnp.bfloat16)                         # (Bt, S_pad) bf16 operands
    w1 = w_ref[0:s_pad, 0:hidden]                               # (S_pad, H)  bf16
    w2 = w_ref[s_pad:s_pad + hidden, 0:hidden]                  # (H, H)      bf16
    w3 = w_ref[s_pad + hidden:s_pad + 2 * hidden, :]            # (H, 128)    bf16, cols >= A are 0
    b1 = b_ref[0:1, 0:hidden]                                   # (1, H)  f32
    b2 = b_ref[1:2, 0:hidden]                                   # (1, H)  f32
    b3 = b_ref[2:3, :]                                          # (1, 128) f32

    z1 = jnp.dot(x, w1, preferred_element_type=jnp.float32) + b1
    h1 = jnp.tanh(z1.astype(act_dtype)).astype(jnp.bfloat16)
    z2 = jnp.dot(h1, w2, preferred_element_type=jnp.float32) + b2
    h2 = jnp.tanh(z2.astype(act_dtype)).astype(jnp.bfloat16)
    # Lane-dense (Bt, 128) f32 store; the wrapper slices out the valid A columns.
    mean_ref[...] = jnp.dot(h2, w3, preferred_element_type=jnp.float32) + b3


def pack_params(w1, b1, w2, b2, w3, b3, sigma_param):
    """Pack the 7 parameter tensors into 2 padded VMEM slabs + cached sigma."""
    S, H = w1.shape
    A = w3.shape[1]
    assert H == HIDDEN and w2.shape == (H, H) and w3.shape[0] == H
    assert A <= LANE and H <= LANE
    s_pad = _round_up(S, BF16_ROWS)      # 16-row aligned so bf16 slab slices stay cheap

    w_packed = jnp.zeros((s_pad + 2 * H, LANE), jnp.bfloat16)
    w_packed = w_packed.at[:S, :H].set(w1.astype(jnp.bfloat16))
    w_packed = w_packed.at[s_pad:s_pad + H, :H].set(w2.astype(jnp.bfloat16))
    w_packed = w_packed.at[s_pad + H:s_pad + 2 * H, :A].set(w3.astype(jnp.bfloat16))

    b_packed = jnp.zeros((SUBLANE, LANE), jnp.float32)
    b_packed = b_packed.at[0, :H].set(b1.astype(jnp.float32))
    b_packed = b_packed.at[1, :H].set(b2.astype(jnp.float32))
    b_packed = b_packed.at[2, :A].set(b3.astype(jnp.float32))

    # sigma = softplus(sigma_param) does not depend on x: compute it once per
    # parameter update (numerically stable form) instead of in every forward.
    sigma = jnp.maximum(sigma_param, 0.0) + jnp.log1p(jnp.exp(-jnp.abs(sigma_param)))
    return (w_packed, b_packed, sigma.astype(jnp.float32))


def policy_forward(x, packed_params, *, batch_tile=2048):
    """x: (B, state_space) f32. Returns (action_mean (B, A), sigma (A,))."""
    w_packed, b_packed, sigma = packed_params
    B, S = x.shape
    s_pad = w_packed.shape[0] - 2 * HIDDEN
    A = sigma.shape[0]

    # Only pad the feature dim (to the 16-aligned slab segment) and, for tiny
    # batches, the batch dim up to one sublane.  Large batches are NOT copied:
    # ragged last tiles are masked on writeback and sliced off below.
    pad_rows = SUBLANE - B if B < SUBLANE else 0
    pad_cols = s_pad - S
    xk = x.astype(jnp.float32)
    if pad_rows or pad_cols:
        xk = jnp.pad(xk, ((0, pad_rows), (0, pad_cols)))
    b_rows = B + pad_rows

    # Batch tiling: single tile for tiny batches; >= 2 tiles whenever B > 64 so
    # both v7x TensorCores get work; fixed 2048-row tiles for huge batches.
    if b_rows <= 64:
        bt = _round_up(b_rows, SUBLANE)
    elif b_rows <= 2 * batch_tile:
        bt = _round_up(pl.cdiv(b_rows, 2), SUBLANE)
    else:
        bt = batch_tile
    grid_b = pl.cdiv(b_rows, bt)

    kernel = functools.partial(policy_kernel, s_pad=s_pad, hidden=HIDDEN,
                               act_dtype=_act_dtype())
    flops = 2 * b_rows * (s_pad * HIDDEN + HIDDEN * HIDDEN + HIDDEN * LANE)
    bytes_accessed = (4 * xk.size + 2 * w_packed.size + 4 * b_packed.size
                      + 4 * b_rows * LANE)
    cost = pl.CostEstimate(flops=flops,
                           transcendentals=2 * b_rows * HIDDEN,
                           bytes_accessed=bytes_accessed)

    mean_pad = pl.pallas_call(
        kernel,
        out_shape=jax.ShapeDtypeStruct((b_rows, LANE), jnp.float32),
        grid=(grid_b,),
        in_specs=[
            pl.BlockSpec((bt, s_pad), lambda i: (i, 0)),        # x: tiled over batch
            pl.BlockSpec(w_packed.shape, lambda i: (0, 0)),     # weights: VMEM-resident
            pl.BlockSpec(b_packed.shape, lambda i: (0, 0)),     # biases:  VMEM-resident
        ],
        out_specs=pl.BlockSpec((bt, LANE), lambda i: (i, 0)),
        compiler_params=pltpu.CompilerParams(
            dimension_semantics=("parallel",)),
        cost_estimate=cost,
    )(xk, w_packed, b_packed)

    # TODO(synk): torch.distributions.Normal(action_mean, sigma) has no Pallas
    # equivalent; return its (mean, sigma) parameters instead.
    return mean_pad[:B, :A], sigma


def init_params(key, state_space, action_space, hidden=HIDDEN):
    """Matches Policy.init_weights(): normal_(weight), zeros_(bias), sigma=0.5."""
    k1, k2, k3 = jax.random.split(key, 3)
    w1 = jax.random.normal(k1, (state_space, hidden), jnp.float32)   # stored (in, out)
    b1 = jnp.zeros((hidden,), jnp.float32)
    w2 = jax.random.normal(k2, (hidden, hidden), jnp.float32)
    b2 = jnp.zeros((hidden,), jnp.float32)
    w3 = jax.random.normal(k3, (hidden, action_space), jnp.float32)
    b3 = jnp.zeros((action_space,), jnp.float32)
    sigma_param = jnp.zeros((action_space,), jnp.float32) + 0.5
    return (w1, b1, w2, b2, w3, b3, sigma_param)


if __name__ == "__main__":
    state_space, action_space = 8, 4
    key = jax.random.PRNGKey(0)
    kx, kp, kb = jax.random.split(key, 3)

    raw = init_params(kp, state_space, action_space)
    packed = pack_params(*raw)
    fwd = jax.jit(policy_forward)

    def reference(xv):
        w1, b1, w2, b2, w3, b3, sigma_param = raw
        h1 = jnp.tanh(xv @ w1 + b1)
        h2 = jnp.tanh(h1 @ w2 + b2)
        return h2 @ w3 + b3, jax.nn.softplus(sigma_param)

    def check_close(got, ref, tag):
        # bf16 matmul operands -> ~1e-2 relative accuracy vs the f32 reference
        # (weights are unscaled standard-normal, so activations are large).
        err = float(jnp.linalg.norm((got - ref).ravel()))
        den = float(jnp.linalg.norm(ref.ravel())) + 1e-6
        assert err / den < 0.1, f"{tag}: relative error {err / den:.4f}"
        assert bool(jnp.allclose(got, ref, atol=1.5, rtol=0.1)), f"{tag}: elementwise mismatch"

    # Small batch (matches the original module's action-selection usage).
    x_small = jax.random.normal(kx, (2, state_space), jnp.float32)
    mean, sigma = fwd(x_small, packed)
    jax.block_until_ready((mean, sigma))
    mean_ref, sigma_ref = reference(x_small)
    assert mean.shape == (2, action_space) and sigma.shape == (action_space,)
    check_close(mean, mean_ref, "small-batch mean")
    assert bool(jnp.allclose(sigma, sigma_ref, atol=1e-6, rtol=1e-6))

    # Larger vectorized-environment batch exercising the 2-tile parallel grid
    # path and a ragged (non-multiple-of-tile) last block.
    x_big = jax.random.normal(kb, (1030, state_space), jnp.float32)
    mean_b, _ = fwd(x_big, packed)
    jax.block_until_ready(mean_b)
    mean_b_ref, _ = reference(x_big)
    assert mean_b.shape == (1030, action_space)
    check_close(mean_b, mean_b_ref, "large-batch mean")

    print("KERNEL_OK")
</pallas_src>

<mosaic_0001>
module attributes {stable_mosaic.version = 11 : i64} {
  func.func @policy_kernel(%arg0: i32, %arg1: memref<8x16xf32, #tpu.memory_space<vmem>>, %arg2: memref<144x128xbf16, #tpu.memory_space<vmem>>, %arg3: memref<8x128xf32, #tpu.memory_space<vmem>>, %arg4: memref<8x128xf32, #tpu.memory_space<vmem>>) attributes {dimension_semantics = [#tpu.dimension_semantics<parallel>], iteration_bounds = array<i64: 1>, scalar_prefetch = 0 : i64, scratch_operands = 0 : i64, tpu.core_type = #tpu.core_type<tc>, window_params = [{transform_indices = @transform_0, window_bounds = array<i64: 8, 16>}, {pipeline_mode = #tpu.pipeline_mode<synchronous>, transform_indices = @transform_1, window_bounds = array<i64: 144, 128>}, {pipeline_mode = #tpu.pipeline_mode<synchronous>, transform_indices = @transform_2, window_bounds = array<i64: 8, 128>}, {transform_indices = @transform_3, window_bounds = array<i64: 8, 128>}]} {
    %c0 = arith.constant 0 : index
    %c0_0 = arith.constant 0 : index
    %0 = vector.load %arg1[%c0, %c0_0] : memref<8x16xf32, #tpu.memory_space<vmem>>, vector<8x16xf32>
    %1 = arith.truncf %0 : vector<8x16xf32> to vector<8x16xbf16>
    %c0_1 = arith.constant 0 : index
    %c0_2 = arith.constant 0 : index
    %2 = vector.load %arg2[%c0_1, %c0_2] : memref<144x128xbf16, #tpu.memory_space<vmem>>, vector<16x64xbf16>
    %c16 = arith.constant 16 : index
    %c0_3 = arith.constant 0 : index
    %3 = vector.load %arg2[%c16, %c0_3] : memref<144x128xbf16, #tpu.memory_space<vmem>>, vector<64x64xbf16>
    %c80 = arith.constant 80 : index
    %c0_4 = arith.constant 0 : index
    %4 = vector.load %arg2[%c80, %c0_4] : memref<144x128xbf16, #tpu.memory_space<vmem>>, vector<64x128xbf16>
    %c0_5 = arith.constant 0 : index
    %c0_6 = arith.constant 0 : index
    %5 = vector.load %arg3[%c0_5, %c0_6] : memref<8x128xf32, #tpu.memory_space<vmem>>, vector<1x64xf32>
    %c1 = arith.constant 1 : index
    %c0_7 = arith.constant 0 : index
    %6 = vector.load %arg3[%c1, %c0_7] : memref<8x128xf32, #tpu.memory_space<vmem>>, vector<1x64xf32>
    %c2 = arith.constant 2 : index
    %c0_8 = arith.constant 0 : index
    %7 = vector.load %arg3[%c2, %c0_8] : memref<8x128xf32, #tpu.memory_space<vmem>>, vector<1x128xf32>
    %cst = arith.constant dense<0.000000e+00> : vector<8x64xf32>
    %8 = tpu.matmul %1, %2, %cst {dimension_numbers = #tpu.dot_dimension_numbers<[1], [0], [0], [1], [0, 0, 1, 1], [], []>} : vector<8x16xbf16>, vector<16x64xbf16>, vector<8x64xf32> -> vector<8x64xf32>
    %9 = vector.broadcast %5 : vector<1x64xf32> to vector<8x64xf32>
    %10 = arith.addf %8, %9 : vector<8x64xf32>
    %11 = arith.truncf %10 : vector<8x64xf32> to vector<8x64xbf16>
    %12 = math.tanh %11 : vector<8x64xbf16>
    %cst_9 = arith.constant dense<0.000000e+00> : vector<8x64xf32>
    %13 = tpu.matmul %12, %3, %cst_9 {dimension_numbers = #tpu.dot_dimension_numbers<[1], [0], [0], [1], [0, 0, 1, 1], [], []>} : vector<8x64xbf16>, vector<64x64xbf16>, vector<8x64xf32> -> vector<8x64xf32>
    %14 = vector.broadcast %6 : vector<1x64xf32> to vector<8x64xf32>
    %15 = arith.addf %13, %14 : vector<8x64xf32>
    %16 = arith.truncf %15 : vector<8x64xf32> to vector<8x64xbf16>
    %17 = math.tanh %16 : vector<8x64xbf16>
    %cst_10 = arith.constant dense<0.000000e+00> : vector<8x128xf32>
    %18 = tpu.matmul %17, %4, %cst_10 {dimension_numbers = #tpu.dot_dimension_numbers<[1], [0], [0], [1], [0, 0, 1, 1], [], []>} : vector<8x64xbf16>, vector<64x128xbf16>, vector<8x128xf32> -> vector<8x128xf32>
    %19 = vector.broadcast %7 : vector<1x128xf32> to vector<8x128xf32>
    %20 = arith.addf %18, %19 : vector<8x128xf32>
    %c0_11 = arith.constant 0 : index
    %c0_12 = arith.constant 0 : index
    %21 = vector.load %arg4[%c0_11, %c0_12] : memref<8x128xf32, #tpu.memory_space<vmem>>, vector<8x128xf32>
    tpu.vector_store %arg4[%c0_11, %c0_12], %20 {strides = array<i32>} : memref<8x128xf32, #tpu.memory_space<vmem>>, vector<8x128xf32>,
    return
  }
  func.func @transform_0(%arg0: i32) -> (i32, i32) {
    %c0_i32 = arith.constant 0 : i32
    %c0_i32_0 = arith.constant 0 : i32
    return %arg0, %c0_i32 : i32, i32
  }
  func.func @transform_1(%arg0: i32) -> (i32, i32) {
    %c0_i32 = arith.constant 0 : i32
    %c0_i32_0 = arith.constant 0 : i32
    %c0_i32_1 = arith.constant 0 : i32
    return %c0_i32, %c0_i32_0 : i32, i32
  }
  func.func @transform_2(%arg0: i32) -> (i32, i32) {
    %c0_i32 = arith.constant 0 : i32
    %c0_i32_0 = arith.constant 0 : i32
    %c0_i32_1 = arith.constant 0 : i32
    return %c0_i32, %c0_i32_0 : i32, i32
  }
  func.func @transform_3(%arg0: i32) -> (i32, i32) {
    %c0_i32 = arith.constant 0 : i32
    %c0_i32_0 = arith.constant 0 : i32
    return %arg0, %c0_i32 : i32, i32
  }
}

</mosaic_0001>

<llo_original>
// kernel: policy_forward.1
$region0: #{policy_forward.1}
  #allocation0 [shape = 'u32[]', space=smem, size = 0x4, offset = 0x4, fixed_abs, tag = 'smem constant byte address 0x4 - core index']
  #allocation1 [shape = 'u32[144,128]{1,0:T(1,128)}', space=vmem, size = 0x12000, scoped, tag = 'internal scratch']
  %s0 = inlined_call_operand.vmem [shape: f32[8,16], index: 0, kind: input, shape index: {}]
  %s1 = inlined_call_operand.hbm [shape: bf16[144,128], index: 1, kind: input, shape index: {}]
  %s2 = inlined_call_operand.vmem [shape: f32[8,128], index: 2, kind: input, shape index: {}]
  %s3 = inlined_call_operand.vmem [shape: f32[8,128], index: 3, kind: output, shape index: {}]
  %s4 = sld [smem:[#allocation0]]
  $region26: #{policy_forward.1} parent=0
    _
  %s6 = ssub.s32 1, %s4
  %s7 = scalar_select 0, %s6, %s4
  $region1: #{policy_forward.1} parent=0
    #allocation2 [shape = 'u8[36864]{0}', space=vmem, size = 0x9000, scoped, tag = 'input window, operand 1, single buffered']
    #allocation3 [shape = 's32[1]{0}', space=sflag, size = 0x4, scoped, tag = 'scoped memory for policy_forward.1']
    %8 = vsyncpa [#allocation3], 0
    // Predicated region
    $region2: #{policy_forward.1} parent=1 // pred_check
      _
    $region3: #{policy_forward.1} parent=1 // pred_check_branch
      %10 = sbr.rel (0) target = $region5
    $region4: #{policy_forward.1} parent=1 // pred_region
      _
    $region5: #{policy_forward.1} parent=1 // pred_fallthru
      _
    // Predicated region
    $region6: #{policy_forward.1} parent=1 // pred_check
      _
    $region7: #{policy_forward.1} parent=1 // pred_check_branch
      %12 = sbr.rel (0) target = $region9
    $region8: #{policy_forward.1} parent=1 // pred_region
      %s14 = ssub.s32 1152, 1152
      %15 = vsyncadd [#allocation3], %s14
      %s16 = sshll.u32 [#allocation2], 4
      %s17 = int_to_ptr.vmem [resolvable:$true] %s16
      %22 = dma.hbm_to_vmem [thread:$0]  %s1, 1152, %s17, [#allocation3], 64, 64, 4
    $region9: #{policy_forward.1} parent=1 // pred_fallthru
      _
    // Predicated region
    $region10: #{policy_forward.1} parent=1 // pred_check
      _
    $region11: #{policy_forward.1} parent=1 // pred_check_branch
      %24 = sbr.rel (0) target = $region13
    $region12: #{policy_forward.1} parent=1 // pred_region
      _
    $region13: #{policy_forward.1} parent=1 // pred_fallthru
      _
    // Predicated region
    $region14: #{policy_forward.1} parent=1 // pred_check
      _
    $region15: #{policy_forward.1} parent=1 // pred_check_branch
      %26 = sbr.rel (0) target = $region17
    $region16: #{policy_forward.1} parent=1 // pred_region
      %27 = dma.done [#allocation3], 1152
    $region17: #{policy_forward.1} parent=1 // pred_fallthru
      _
    %v29 = vld [vmem:[%s0] sm:$0xff]
    %v30 = vpack.c.bf16 %v29, %v29
    %v31 = vld [vmem:[#allocation2] sm:$0xf]
    %v32 = vld [vmem:[#allocation2 + $0x4] sm:$0xf]
    %v33 = vld [vmem:[#allocation2 + $0x8] sm:$0xf]
    %v34 = vld [vmem:[#allocation2 + $0xc] sm:$0xf]
    %v35 = vld [vmem:[#allocation2 + $0x10] sm:$0xf]
    %v36 = vld [vmem:[#allocation2 + $0x14] sm:$0xf]
    %v37 = vld [vmem:[#allocation2 + $0x18] sm:$0xf]
    %v38 = vld [vmem:[#allocation2 + $0x1c] sm:$0xf]
    %v39 = vld [vmem:[#allocation2 + $0x20] sm:$0xf]
    %v40 = vld [vmem:[#allocation2 + $0x24] sm:$0xf]
    %v41 = vld [vmem:[#allocation2 + $0x28] sm:$0xf]
    %v42 = vld [vmem:[#allocation2 + $0x2c] sm:$0xf]
    %v43 = vld [vmem:[#allocation2 + $0x30] sm:$0xf]
    %v44 = vld [vmem:[#allocation2 + $0x34] sm:$0xf]
    %v45 = vld [vmem:[#allocation2 + $0x38] sm:$0xf]
    %v46 = vld [vmem:[#allocation2 + $0x3c] sm:$0xf]
    %v47 = vld [vmem:[#allocation2 + $0x40] sm:$0xf]
    %v48 = vld [vmem:[#allocation2 + $0x44] sm:$0xf]
    %v49 = vld [vmem:[%s2] sm:$0x1]
    %v50 = vld [vmem:[%s2 + $0x1] sm:$0x1]
    %v51 = vld [vmem:[%s2 + $0x2] sm:$0x1]
    %v52 = vlaneseq
    %v53 = vshrl.u32 %v52, 7
    %v54 = vsub.s32 0, %v53
    %v55 = vrot.slane %v49, %v54
    %v58 = vunpack.c.l.b16 %v31
    %v59 = vunpack.c.l.b16 %v32
    %v60 = vpack.c.b16 %v59, %v58
    %vm62 = vcmask 130048
    %v64 = vsel %vm62, %v30, 0
    %66 = vmatprep.subr.bf16.mxu0 0
    %67 = vmatpush1.bf16.msra.mxu0 %v60
    %68 = vmatprep.subr.bf16.mxu0 0
    %69 = vmatpush1.bf16.msra.mxu0 0
    %70 = vmatprep.subr.bf16.mxu0 0
    %71 = vmatpush1.bf16.msra.mxu0 0
    %72 = vmatprep.subr.bf16.mxu0 0
    %73 = vmatpush1.bf16.msra.mxu0 0
    %74 = vmatprep.subr.bf16.mxu0 0
    %75 = vmatpush1.bf16.msra.mxu0 0
    %76 = vmatprep.subr.bf16.mxu0 0
    %77 = vmatpush1.bf16.msra.mxu0 0
    %78 = vmatprep.subr.bf16.mxu0 0
    %79 = vmatpush1.bf16.msra.mxu0 0
    %80 = vmatprep.subr.bf16.mxu0 0
    %81 = vmatpush1.bf16.msra.mxu0 0
    %82 = vmatprep.subr.bf16.mxu0 0
    %83 = vmatpush1.bf16.msra.mxu0 0
    %84 = vmatprep.subr.bf16.mxu0 0
    %85 = vmatpush1.bf16.msra.mxu0 0
    %86 = vmatprep.subr.bf16.mxu0 0
    %87 = vmatpush1.bf16.msra.mxu0 0
    %88 = vmatprep.subr.bf16.mxu0 0
    %89 = vmatpush1.bf16.msra.mxu0 0
    %90 = vmatprep.subr.bf16.mxu0 0
    %91 = vmatpush1.bf16.msra.mxu0 0
    %92 = vmatprep.subr.bf16.mxu0 0
    %93 = vmatpush1.bf16.msra.mxu0 0
    %94 = vmatprep.subr.bf16.mxu0 0
    %95 = vmatpush1.bf16.msra.mxu0 0
    %96 = vmatprep.subr.bf16.mxu0 0
    %97 = vmatpush1.bf16.msra.mxu0 0
    %98 = vmatprep.mubr.bf16.mxu0 0
    %99 = vmatmul.mubr.bf16.gmra.mrb[0].mxu0 %v64
    %v100 = vpop.f32.mrb[0].mxu0
    %v101 = vadd.f32 %v55, %v100
    %v102 = vpop.f32.mrb[0].mxu0
    %v103 = vpop.f32.mrb[0].mxu0
    %v104 = vpop.f32.mrb[0].mxu0
    %105 = vdwg.mxu0
    %v106 = vpack.c.bf16 %v101, %v101
    %v107 = vtanh.bf16.pop %v106
    %v108 = vlaneseq
    %v109 = vshrl.u32 %v108, 7
    %v110 = vsub.s32 0, %v109
    %v111 = vrot.slane %v50, %v110
    %v120 = vunpack.c.l.b16 %v33
    %v121 = vunpack.c.l.b16 %v34
    %v122 = vunpack.c.l.b16 %v35
    %v123 = vunpack.c.l.b16 %v36
    %v124 = vunpack.c.l.b16 %v37
    %v125 = vunpack.c.l.b16 %v38
    %v126 = vunpack.c.l.b16 %v39
    %v127 = vunpack.c.l.b16 %v40
    %v128 = vpack.c.b16 %v121, %v120
    %v129 = vpack.c.b16 %v123, %v122
    %v130 = vpack.c.b16 %v125, %v124
    %v131 = vpack.c.b16 %v127, %v126
    %vm136 = vcmask 523264
    %v138 = vsel %vm136, %v107, 0
    %140 = vmatprep.subr.bf16.mxu0 0
    %141 = vmatpush1.bf16.msra.mxu0 %v128
    %142 = vmatprep.subr.bf16.mxu0 0
    %143 = vmatpush1.bf16.msra.mxu0 %v129
    %144 = vmatprep.subr.bf16.mxu0 0
    %145 = vmatpush1.bf16.msra.mxu0 %v130
    %146 = vmatprep.subr.bf16.mxu0 0
    %147 = vmatpush1.bf16.msra.mxu0 %v131
    %148 = vmatprep.subr.bf16.mxu0 0
    %149 = vmatpush1.bf16.msra.mxu0 0
    %150 = vmatprep.subr.bf16.mxu0 0
    %151 = vmatpush1.bf16.msra.mxu0 0
    %152 = vmatprep.subr.bf16.mxu0 0
    %153 = vmatpush1.bf16.msra.mxu0 0
    %154 = vmatprep.subr.bf16.mxu0 0
    %155 = vmatpush1.bf16.msra.mxu0 0
    %156 = vmatprep.subr.bf16.mxu0 0
    %157 = vmatpush1.bf16.msra.mxu0 0
    %158 = vmatprep.subr.bf16.mxu0 0
    %159 = vmatpush1.bf16.msra.mxu0 0
    %160 = vmatprep.subr.bf16.mxu0 0
    %161 = vmatpush1.bf16.msra.mxu0 0
    %162 = vmatprep.subr.bf16.mxu0 0
    %163 = vmatpush1.bf16.msra.mxu0 0
    %164 = vmatprep.subr.bf16.mxu0 0
    %165 = vmatpush1.bf16.msra.mxu0 0
    %166 = vmatprep.subr.bf16.mxu0 0
    %167 = vmatpush1.bf16.msra.mxu0 0
    %168 = vmatprep.subr.bf16.mxu0 0
    %169 = vmatpush1.bf16.msra.mxu0 0
    %170 = vmatprep.subr.bf16.mxu0 0
    %171 = vmatpush1.bf16.msra.mxu0 0
    %172 = vmatprep.mubr.bf16.mxu0 0
    %173 = vmatmul.mubr.bf16.gmra.mrb[0].mxu0 %v138
    %v174 = vpop.f32.mrb[0].mxu0
    %v175 = vadd.f32 %v111, %v174
    %v176 = vpop.f32.mrb[0].mxu0
    %v177 = vpop.f32.mrb[0].mxu0
    %v178 = vpop.f32.mrb[0].mxu0
    %179 = vdwg.mxu0
    %v180 = vpack.c.bf16 %v175, %v175
    %v181 = vtanh.bf16.pop %v180
    %v182 = vlaneseq
    %v183 = vshrl.u32 %v182, 7
    %v184 = vsub.s32 0, %v183
    %v185 = vrot.slane %v51, %v184
    %v194 = vunpack.c.l.b16 %v41
    %v195 = vunpack.c.l.b16 %v42
    %v196 = vunpack.c.l.b16 %v43
    %v197 = vunpack.c.l.b16 %v44
    %v198 = vunpack.c.l.b16 %v45
    %v199 = vunpack.c.l.b16 %v46
    %v200 = vunpack.c.l.b16 %v47
    %v201 = vunpack.c.l.b16 %v48
    %v202 = vpack.c.b16 %v195, %v194
    %v203 = vpack.c.b16 %v197, %v196
    %v204 = vpack.c.b16 %v199, %v198
    %v205 = vpack.c.b16 %v201, %v200
    %v211 = vsel %vm136, %v181, 0
    %213 = vmatprep.subr.bf16.mxu0 0
    %214 = vmatpush1.bf16.msra.mxu0 %v202
    %215 = vmatprep.subr.bf16.mxu0 0
    %216 = vmatpush1.bf16.msra.mxu0 %v203
    %217 = vmatprep.subr.bf16.mxu0 0
    %218 = vmatpush1.bf16.msra.mxu0 %v204
    %219 = vmatprep.subr.bf16.mxu0 0
    %220 = vmatpush1.bf16.msra.mxu0 %v205
    %221 = vmatprep.subr.bf16.mxu0 0
    %222 = vmatpush1.bf16.msra.mxu0 0
    %223 = vmatprep.subr.bf16.mxu0 0
    %224 = vmatpush1.bf16.msra.mxu0 0
    %225 = vmatprep.subr.bf16.mxu0 0
    %226 = vmatpush1.bf16.msra.mxu0 0
    %227 = vmatprep.subr.bf16.mxu0 0
    %228 = vmatpush1.bf16.msra.mxu0 0
    %229 = vmatprep.subr.bf16.mxu0 0
    %230 = vmatpush1.bf16.msra.mxu0 0
    %231 = vmatprep.subr.bf16.mxu0 0
    %232 = vmatpush1.bf16.msra.mxu0 0
    %233 = vmatprep.subr.bf16.mxu0 0
    %234 = vmatpush1.bf16.msra.mxu0 0
    %235 = vmatprep.subr.bf16.mxu0 0
    %236 = vmatpush1.bf16.msra.mxu0 0
    %237 = vmatprep.subr.bf16.mxu0 0
    %238 = vmatpush1.bf16.msra.mxu0 0
    %239 = vmatprep.subr.bf16.mxu0 0
    %240 = vmatpush1.bf16.msra.mxu0 0
    %241 = vmatprep.subr.bf16.mxu0 0
    %242 = vmatpush1.bf16.msra.mxu0 0
    %243 = vmatprep.subr.bf16.mxu0 0
    %244 = vmatpush1.bf16.msra.mxu0 0
    %245 = vmatprep.mubr.bf16.mxu0 0
    %246 = vmatmul.mubr.bf16.gmra.mrb[0].mxu0 %v211
    %v247 = vpop.f32.mrb[0].mxu0
    %v248 = vadd.f32 %v185, %v247
    %v249 = vpop.f32.mrb[0].mxu0
    %v250 = vpop.f32.mrb[0].mxu0
    %v251 = vpop.f32.mrb[0].mxu0
    %252 = vdwg.mxu0
    %253 = vst [vmem:[%s3] sm:$0xff] %v248
    // Predicated region
    $region18: #{policy_forward.1} parent=1 // pred_check
      _
    $region19: #{policy_forward.1} parent=1 // pred_check_branch
      %255 = sbr.rel (0) target = $region21
    $region20: #{policy_forward.1} parent=1 // pred_region
      _
    $region21: #{policy_forward.1} parent=1 // pred_fallthru
      _
    // Predicated region
    $region22: #{policy_forward.1} parent=1 // pred_check
      _
    $region23: #{policy_forward.1} parent=1 // pred_check_branch
      %257 = sbr.rel (0) target = $region25
    $region24: #{policy_forward.1} parent=1 // pred_region
      _
    $region25: #{policy_forward.1} parent=1 // pred_fallthru
      _
    %258 = vsyncpa [#allocation3], 1

</llo_original>
